<compile_context>
chip_gen: v7x
topology: tpu7x:2x2x1
jax: 0.10.0
libtpu: 0.0.40
codegen_flags: <defaults>
</compile_context>

<pallas_src>
import jax
import jax.numpy as jnp
from jax.experimental import pallas as pl
from jax.experimental.pallas import tpu as pltpu


def _round_up(n, m):
    return ((n + m - 1) // m) * m


def _pad_to(a, shape):
    return jnp.pad(a, [(0, s - d) for d, s in zip(a.shape, shape)])


# --------------------------- BiLSTM layer kernel -----------------------------
def _bilstm_layer_kernel(x_ref, wih_ref, whh_ref, b_ref, o_ref, h_sc, c_sc):
    """One direction of one LSTM layer over the full sequence.

    x_ref:   (T, Bp, Dp)   bf16 (already time-reversed for the backward dir)
    wih_ref: (Dp, 4*Hp)    bf16, gate blocks [i|f|g|o], each Hp lanes wide
    whh_ref: (Hp, 4*Hp)    bf16
    b_ref:   (1, 4*Hp)     f32  (b_ih + b_hh), zero in padded columns
    o_ref:   (T, Bp, Hp)   f32  hidden states
    h_sc, c_sc: (Bp, Hp)   f32  recurrent state in VMEM scratch
    """
    T = x_ref.shape[0]
    Hp = h_sc.shape[-1]

    h_sc[...] = jnp.zeros_like(h_sc)
    c_sc[...] = jnp.zeros_like(c_sc)

    wih = wih_ref[...]
    whh = whh_ref[...]
    b = b_ref[...]

    def step(t, carry):
        x_t = x_ref[t]                                           # (Bp, Dp) bf16
        z = (jnp.dot(x_t, wih, preferred_element_type=jnp.float32)
             + jnp.dot(h_sc[...].astype(jnp.bfloat16), whh,
                       preferred_element_type=jnp.float32)
             + b)                                                # (Bp, 4*Hp) f32
        i = jax.nn.sigmoid(z[:, 0 * Hp:1 * Hp])
        f = jax.nn.sigmoid(z[:, 1 * Hp:2 * Hp])
        g = jnp.tanh(z[:, 2 * Hp:3 * Hp])
        o = jax.nn.sigmoid(z[:, 3 * Hp:4 * Hp])
        c = f * c_sc[...] + i * g
        h = o * jnp.tanh(c)
        c_sc[...] = c
        h_sc[...] = h
        o_ref[t] = h
        return carry

    jax.lax.fori_loop(0, T, step, 0)


def _pack_lstm_dir(wih, whh, bih, bhh, Dp, Hp):
    """Torch layout (4H,D)/(4H,H)/(4H,) -> transposed, per-gate zero-padded."""
    def pack_w(w, rows_p):
        blocks = jnp.split(w, 4, axis=0)                         # 4 x (H, rows)
        return jnp.concatenate(
            [_pad_to(blk.T, (rows_p, Hp)) for blk in blocks], axis=1)

    bvec = bih + bhh
    b_p = jnp.concatenate(
        [_pad_to(seg, (Hp,)) for seg in jnp.split(bvec, 4)]).reshape(1, 4 * Hp)
    return pack_w(wih, Dp), pack_w(whh, Hp), b_p


def bilstm_layer(x, dir_params, hidden_dim):
    """x: (T, B, D) f32; dir_params = [(wih, whh, bih, bhh)] * 2 (torch layout).

    Returns (T, B, 2*hidden_dim) f32, [forward | backward] halves, matching
    torch.nn.LSTM(bidirectional=True) output for one layer (eval mode).
    """
    T, B, D = x.shape
    H = hidden_dim
    Dp = _round_up(D, 128)      # lane-dense feature dims (128-lane vregs)
    Hp = _round_up(H, 128)
    Bp = _round_up(B, 8)        # sublane-aligned batch

    packed = [_pack_lstm_dir(*p, Dp=Dp, Hp=Hp) for p in dir_params]
    wih_s = jnp.stack([p[0] for p in packed]).astype(jnp.bfloat16)  # (2,Dp,4Hp)
    whh_s = jnp.stack([p[1] for p in packed]).astype(jnp.bfloat16)  # (2,Hp,4Hp)
    b_s = jnp.stack([p[2] for p in packed])                         # (2,1,4Hp)

    xp = _pad_to(x, (T, Bp, Dp)).astype(jnp.bfloat16)
    x_s = jnp.stack([xp, xp[::-1]])                                 # (2,T,Bp,Dp)

    flops = 16 * T * Bp * Hp * (Dp + Hp)
    bytes_accessed = int(x_s.size * 2 + wih_s.size * 2 + whh_s.size * 2
                         + b_s.size * 4 + 2 * T * Bp * Hp * 4)

    out = pl.pallas_call(
        _bilstm_layer_kernel,
        out_shape=jax.ShapeDtypeStruct((2, T, Bp, Hp), jnp.float32),
        grid=(2,),
        in_specs=[
            pl.BlockSpec((None, T, Bp, Dp), lambda d: (d, 0, 0, 0)),
            pl.BlockSpec((None, Dp, 4 * Hp), lambda d: (d, 0, 0)),
            pl.BlockSpec((None, Hp, 4 * Hp), lambda d: (d, 0, 0)),
            pl.BlockSpec((None, 1, 4 * Hp), lambda d: (d, 0, 0)),
        ],
        out_specs=pl.BlockSpec((None, T, Bp, Hp), lambda d: (d, 0, 0, 0)),
        scratch_shapes=[pltpu.VMEM((Bp, Hp), jnp.float32),
                        pltpu.VMEM((Bp, Hp), jnp.float32)],
        compiler_params=pltpu.CompilerParams(
            dimension_semantics=("arbitrary",),
            vmem_limit_bytes=32 * 1024 * 1024),
        cost_estimate=pl.CostEstimate(flops=flops,
                                      transcendentals=2 * T * Bp * 5 * Hp,
                                      bytes_accessed=bytes_accessed),
    )(x_s, wih_s, whh_s, b_s)

    fw = out[0, :, :B, :H]          # forward direction, natural time order
    bw = out[1, ::-1, :B, :H]       # backward direction, flipped back in time
    return jnp.concatenate([fw, bw], axis=-1)


# --------------------------- fused dual ArcMLP --------------------------------
def _arc_mlp_pair_kernel(x_ref, w1_ref, b1_ref, w2_ref, b2_ref, o_ref):
    # relu(fc2(dropout(relu(fc1(x))))); dropout is identity in eval mode.
    h = jnp.dot(x_ref[...], w1_ref[...], preferred_element_type=jnp.float32)
    h = jnp.maximum(h + b1_ref[...], 0.0)                       # f32 epilogue
    # TODO(synk): training-mode Dropout2d (channel-wise Bernoulli mask with
    # 1/(1-p) scaling via pltpu.prng_seed / pltpu.prng_random_bits).
    y = jnp.dot(h.astype(jnp.bfloat16), w2_ref[...],
                preferred_element_type=jnp.float32)
    y = jnp.maximum(y + b2_ref[...], 0.0)
    o_ref[...] = y.astype(o_ref.dtype)


def arc_mlp_pair(x_head, x_dep, head_params, dep_params):
    """Both ArcMLP heads in ONE pallas_call (amortizes launch/DMA overhead).

    x_*: (B, Din) f32.  Params in torch layout: w1 (H, Din), b1 (H,),
    w2 (Dout, H), b2 (Dout,).  Returns (head, dependent), each (B, Dout) f32.
    """
    B, Din = x_head.shape
    H = head_params[0].shape[0]
    Dout = head_params[2].shape[0]

    Dinp = _round_up(Din, 128)
    Hp = _round_up(H, 128)
    Doutp = _round_up(Dout, 128)     # lane-dense output -> full vst stores
    Bp0 = _round_up(B, 8)
    TB = min(Bp0, 512)               # batch tile; grows to 512 rows for big B
    Bp = _round_up(Bp0, TB)

    def pack(params):
        w1, b1, w2, b2 = params
        return (_pad_to(w1.T, (Dinp, Hp)).astype(jnp.bfloat16),
                _pad_to(b1, (Hp,)).reshape(1, Hp),
                _pad_to(w2.T, (Hp, Doutp)).astype(jnp.bfloat16),
                _pad_to(b2, (Doutp,)).reshape(1, Doutp))

    hw1, hb1, hw2, hb2 = pack(head_params)
    dw1, db1, dw2, db2 = pack(dep_params)
    w1_s, b1_s = jnp.stack([hw1, dw1]), jnp.stack([hb1, db1])
    w2_s, b2_s = jnp.stack([hw2, dw2]), jnp.stack([hb2, db2])
    x_s = jnp.stack([_pad_to(x_head, (Bp, Dinp)),
                     _pad_to(x_dep, (Bp, Dinp))]).astype(jnp.bfloat16)

    flops = 2 * 2 * Bp * (Dinp * Hp + Hp * Doutp)
    bytes_accessed = int(x_s.size * 2 + w1_s.size * 2 + w2_s.size * 2
                         + b1_s.size * 4 + b2_s.size * 4 + 2 * Bp * Doutp * 4)

    out = pl.pallas_call(
        _arc_mlp_pair_kernel,
        out_shape=jax.ShapeDtypeStruct((2, Bp, Doutp), jnp.float32),
        # (head, batch tile); batch innermost so per-head weights stay
        # VMEM-resident across consecutive grid steps.
        grid=(2, Bp // TB),
        in_specs=[
            pl.BlockSpec((None, TB, Dinp), lambda m, i: (m, i, 0)),
            pl.BlockSpec((None, Dinp, Hp), lambda m, i: (m, 0, 0)),
            pl.BlockSpec((None, 1, Hp), lambda m, i: (m, 0, 0)),
            pl.BlockSpec((None, Hp, Doutp), lambda m, i: (m, 0, 0)),
            pl.BlockSpec((None, 1, Doutp), lambda m, i: (m, 0, 0)),
        ],
        out_specs=pl.BlockSpec((None, TB, Doutp), lambda m, i: (m, i, 0)),
        compiler_params=pltpu.CompilerParams(
            dimension_semantics=("parallel", "parallel"),
            vmem_limit_bytes=32 * 1024 * 1024),
        cost_estimate=pl.CostEstimate(flops=flops, transcendentals=0,
                                      bytes_accessed=bytes_accessed),
    )(x_s, w1_s, b1_s, w2_s, b2_s)

    return out[0, :B, :Dout], out[1, :B, :Dout]


# ------------------------------- Encoder --------------------------------------
def encoder_forward(x, lstm_params, head_params, dep_params, hidden_dim):
    """Pallas Encoder forward (inference mode).  x: (T, B, E) f32, time-major."""
    y = x
    for layer in lstm_params:
        y = bilstm_layer(y, layer, hidden_dim)
        # nn.LSTM inter-layer dropout: identity in eval mode.
    head_in = y[0, :, :hidden_dim]      # torch.chunk(y, 2, dim=2)[0][0]
    dep_in = y[0, :, hidden_dim:]       # torch.chunk(y, 2, dim=2)[1][0]
    return arc_mlp_pair(head_in, dep_in, head_params, dep_params)


# --------------------------- pure-JAX reference --------------------------------
def encoder_reference(x, lstm_params, head_params, dep_params, hidden_dim):
    """Reference with the same bf16-matmul / f32-gate numerics as the kernels."""
    def bdot(a, b):
        return jnp.dot(a.astype(jnp.bfloat16), b.astype(jnp.bfloat16),
                       preferred_element_type=jnp.float32)

    H = hidden_dim
    B = x.shape[1]
    y = x
    for layer in lstm_params:
        outs = []
        for d in range(2):
            wih, whh, bih, bhh = layer[d]
            bias = (bih + bhh)[None, :]
            seq = y if d == 0 else y[::-1]
            h = jnp.zeros((B, H), jnp.float32)
            c = jnp.zeros((B, H), jnp.float32)
            hs = []
            for t in range(seq.shape[0]):
                z = bdot(seq[t], wih.T) + bdot(h, whh.T) + bias
                i, f, g, o = jnp.split(z, 4, axis=-1)
                c = jax.nn.sigmoid(f) * c + jax.nn.sigmoid(i) * jnp.tanh(g)
                h = jax.nn.sigmoid(o) * jnp.tanh(c)
                hs.append(h)
            hs = jnp.stack(hs)
            outs.append(hs if d == 0 else hs[::-1])
        y = jnp.concatenate(outs, axis=-1)

    def mlp(v, params):
        w1, b1, w2, b2 = params
        hdn = jnp.maximum(bdot(v, w1.T) + b1, 0.0)
        return jnp.maximum(bdot(hdn, w2.T) + b2, 0.0)

    return mlp(y[0, :, :H], head_params), mlp(y[0, :, H:], dep_params)


# ------------------------------ param init ------------------------------------
def init_encoder_params(key, embed_dim, hidden_dim, num_layers,
                        mlp_hidden_dim, mlp_output_dim):
    keys = iter(jax.random.split(key, num_layers * 2 * 4 + 2))
    bound = 1.0 / (hidden_dim ** 0.5)
    lstm_params = []
    for layer in range(num_layers):
        in_dim = embed_dim if layer == 0 else 2 * hidden_dim
        dirs = []
        for _ in range(2):
            wih = jax.random.uniform(next(keys), (4 * hidden_dim, in_dim),
                                     jnp.float32, -bound, bound)
            whh = jax.random.uniform(next(keys), (4 * hidden_dim, hidden_dim),
                                     jnp.float32, -bound, bound)
            bih = jax.random.uniform(next(keys), (4 * hidden_dim,),
                                     jnp.float32, -bound, bound)
            bhh = jax.random.uniform(next(keys), (4 * hidden_dim,),
                                     jnp.float32, -bound, bound)
            dirs.append((wih, whh, bih, bhh))
        lstm_params.append(dirs)

    def linear(k, fan_in, fan_out):
        b = 1.0 / (fan_in ** 0.5)
        kw, kb = jax.random.split(k)
        return (jax.random.uniform(kw, (fan_out, fan_in), jnp.float32, -b, b),
                jax.random.uniform(kb, (fan_out,), jnp.float32, -b, b))

    def mlp_params(k):
        k1, k2 = jax.random.split(k)
        w1, b1 = linear(k1, hidden_dim, mlp_hidden_dim)
        w2, b2 = linear(k2, mlp_hidden_dim, mlp_output_dim)
        return (w1, b1, w2, b2)

    head_params = mlp_params(next(keys))
    dep_params = mlp_params(next(keys))
    return lstm_params, head_params, dep_params


if __name__ == "__main__":
    key = jax.random.PRNGKey(0)
    kx, kp = jax.random.split(key)

    # Small shapes consistent with Encoder's time-major input (T, B, embed).
    # (Real defaults: embed=100, hidden=400, layers=3, MLP 1024 -> 500.)
    T, B = 8, 4
    embed_dim, hidden_dim, num_layers = 32, 64, 3
    mlp_hidden_dim, mlp_output_dim = 128, 64

    x = jax.random.normal(kx, (T, B, embed_dim), jnp.float32)
    lstm_params, head_params, dep_params = init_encoder_params(
        kp, embed_dim, hidden_dim, num_layers, mlp_hidden_dim, mlp_output_dim)

    head, dependent = encoder_forward(x, lstm_params, head_params, dep_params,
                                      hidden_dim)
    jax.block_until_ready((head, dependent))

    ref_head, ref_dep = encoder_reference(x, lstm_params, head_params,
                                          dep_params, hidden_dim)
    assert head.shape == (B, mlp_output_dim)
    assert dependent.shape == (B, mlp_output_dim)
    assert jnp.allclose(head, ref_head, atol=2e-3, rtol=2e-3)
    assert jnp.allclose(dependent, ref_dep, atol=2e-3, rtol=2e-3)
    print("KERNEL_OK")
</pallas_src>

<mosaic_0001>
module attributes {stable_mosaic.version = 11 : i64} {
  func.func @_bilstm_layer_kernel(%arg0: i32, %arg1: memref<1x8x8x128xbf16, #tpu.memory_space<vmem>>, %arg2: memref<1x128x512xbf16, #tpu.memory_space<vmem>>, %arg3: memref<1x128x512xbf16, #tpu.memory_space<vmem>>, %arg4: memref<1x1x512xf32, #tpu.memory_space<vmem>>, %arg5: memref<1x8x8x128xf32, #tpu.memory_space<vmem>>, %arg6: memref<8x128xf32, #tpu.memory_space<vmem>>, %arg7: memref<8x128xf32, #tpu.memory_space<vmem>>) attributes {dimension_semantics = [#tpu.dimension_semantics<arbitrary>], iteration_bounds = array<i64: 2>, scalar_prefetch = 0 : i64, scratch_operands = 2 : i64, tpu.core_type = #tpu.core_type<tc>, window_params = [{transform_indices = @transform_0, window_bounds = array<i64: 1, 8, 8, 128>}, {transform_indices = @transform_1, window_bounds = array<i64: 1, 128, 512>}, {transform_indices = @transform_2, window_bounds = array<i64: 1, 128, 512>}, {transform_indices = @transform_3, window_bounds = array<i64: 1, 1, 512>}, {transform_indices = @transform_4, window_bounds = array<i64: 1, 8, 8, 128>}]} {
    %cst = arith.constant 0.000000e+00 : f32
    %0 = vector.broadcast %cst : f32 to vector<8x128xf32>
    %c0 = arith.constant 0 : index
    %c0_0 = arith.constant 0 : index
    %1 = vector.load %arg6[%c0, %c0_0] : memref<8x128xf32, #tpu.memory_space<vmem>>, vector<8x128xf32>
    tpu.vector_store %arg6[%c0, %c0_0], %0 {strides = array<i32>} : memref<8x128xf32, #tpu.memory_space<vmem>>, vector<8x128xf32>,
    %cst_1 = arith.constant 0.000000e+00 : f32
    %2 = vector.broadcast %cst_1 : f32 to vector<8x128xf32>
    %c0_2 = arith.constant 0 : index
    %c0_3 = arith.constant 0 : index
    %3 = vector.load %arg7[%c0_2, %c0_3] : memref<8x128xf32, #tpu.memory_space<vmem>>, vector<8x128xf32>
    tpu.vector_store %arg7[%c0_2, %c0_3], %2 {strides = array<i32>} : memref<8x128xf32, #tpu.memory_space<vmem>>, vector<8x128xf32>,
    %c0_4 = arith.constant 0 : index
    %c0_5 = arith.constant 0 : index
    %c0_6 = arith.constant 0 : index
    %4 = vector.load %arg2[%c0_4, %c0_5, %c0_6] : memref<1x128x512xbf16, #tpu.memory_space<vmem>>, vector<1x128x512xbf16>
    %5 = vector.shape_cast %4 : vector<1x128x512xbf16> to vector<128x512xbf16>
    %c0_7 = arith.constant 0 : index
    %c0_8 = arith.constant 0 : index
    %c0_9 = arith.constant 0 : index
    %6 = vector.load %arg3[%c0_7, %c0_8, %c0_9] : memref<1x128x512xbf16, #tpu.memory_space<vmem>>, vector<1x128x512xbf16>
    %7 = vector.shape_cast %6 : vector<1x128x512xbf16> to vector<128x512xbf16>
    %c0_10 = arith.constant 0 : index
    %c0_11 = arith.constant 0 : index
    %c0_12 = arith.constant 0 : index
    %8 = vector.load %arg4[%c0_10, %c0_11, %c0_12] : memref<1x1x512xf32, #tpu.memory_space<vmem>>, vector<1x1x512xf32>
    %9 = vector.shape_cast %8 : vector<1x1x512xf32> to vector<1x512xf32>
    %c0_i32 = arith.constant 0 : i32
    %c8_i32 = arith.constant 8 : i32
    %10 = arith.addi %c0_i32, %c8_i32 : i32
    %c1_i32 = arith.constant 1 : i32
    scf.for %arg8 = %c0_i32 to %10 step %c1_i32  : i32 {
      %c0_14 = arith.constant 0 : index
      %11 = arith.index_cast %arg8 : i32 to index
      %c0_15 = arith.constant 0 : index
      %c0_16 = arith.constant 0 : index
      %12 = vector.load %arg1[%c0_14, %11, %c0_15, %c0_16] : memref<1x8x8x128xbf16, #tpu.memory_space<vmem>>, vector<1x1x8x128xbf16>
      %13 = vector.shape_cast %12 : vector<1x1x8x128xbf16> to vector<8x128xbf16>
      %cst_17 = arith.constant dense<0.000000e+00> : vector<8x512xf32>
      %14 = tpu.matmul %13, %5, %cst_17 {dimension_numbers = #tpu.dot_dimension_numbers<[1], [0], [0], [1], [0, 0, 1, 1], [], []>} : vector<8x128xbf16>, vector<128x512xbf16>, vector<8x512xf32> -> vector<8x512xf32>
      %c0_18 = arith.constant 0 : index
      %c0_19 = arith.constant 0 : index
      %15 = vector.load %arg6[%c0_18, %c0_19] : memref<8x128xf32, #tpu.memory_space<vmem>>, vector<8x128xf32>
      %16 = arith.truncf %15 : vector<8x128xf32> to vector<8x128xbf16>
      %cst_20 = arith.constant dense<0.000000e+00> : vector<8x512xf32>
      %17 = tpu.matmul %16, %7, %cst_20 {dimension_numbers = #tpu.dot_dimension_numbers<[1], [0], [0], [1], [0, 0, 1, 1], [], []>} : vector<8x128xbf16>, vector<128x512xbf16>, vector<8x512xf32> -> vector<8x512xf32>
      %18 = arith.addf %14, %17 : vector<8x512xf32>
      %19 = vector.broadcast %9 : vector<1x512xf32> to vector<8x512xf32>
      %20 = arith.addf %18, %19 : vector<8x512xf32>
      %21 = vector.extract_strided_slice %20 {offsets = [0, 0], sizes = [8, 128], strides = [1, 1]} : vector<8x512xf32> to vector<8x128xf32>
      %22 = arith.negf %21 : vector<8x128xf32>
      %23 = math.exp %22 : vector<8x128xf32>
      %cst_21 = arith.constant 1.000000e+00 : f32
      %24 = vector.broadcast %cst_21 : f32 to vector<8x128xf32>
      %25 = arith.addf %24, %23 : vector<8x128xf32>
      %26 = arith.divf %24, %25 : vector<8x128xf32>
      %27 = vector.extract_strided_slice %20 {offsets = [0, 128], sizes = [8, 128], strides = [1, 1]} : vector<8x512xf32> to vector<8x128xf32>
      %28 = arith.negf %27 : vector<8x128xf32>
      %29 = math.exp %28 : vector<8x128xf32>
      %cst_22 = arith.constant 1.000000e+00 : f32
      %30 = vector.broadcast %cst_22 : f32 to vector<8x128xf32>
      %31 = arith.addf %30, %29 : vector<8x128xf32>
      %32 = arith.divf %30, %31 : vector<8x128xf32>
      %33 = vector.extract_strided_slice %20 {offsets = [0, 256], sizes = [8, 128], strides = [1, 1]} : vector<8x512xf32> to vector<8x128xf32>
      %34 = math.tanh %33 : vector<8x128xf32>
      %35 = vector.extract_strided_slice %20 {offsets = [0, 384], sizes = [8, 128], strides = [1, 1]} : vector<8x512xf32> to vector<8x128xf32>
      %36 = arith.negf %35 : vector<8x128xf32>
      %37 = math.exp %36 : vector<8x128xf32>
      %cst_23 = arith.constant 1.000000e+00 : f32
      %38 = vector.broadcast %cst_23 : f32 to vector<8x128xf32>
      %39 = arith.addf %38, %37 : vector<8x128xf32>
      %40 = arith.divf %38, %39 : vector<8x128xf32>
      %c0_24 = arith.constant 0 : index
      %c0_25 = arith.constant 0 : index
      %41 = vector.load %arg7[%c0_24, %c0_25] : memref<8x128xf32, #tpu.memory_space<vmem>>, vector<8x128xf32>
      %42 = arith.mulf %32, %41 : vector<8x128xf32>
      %43 = arith.mulf %26, %34 : vector<8x128xf32>
      %44 = arith.addf %42, %43 : vector<8x128xf32>
      %45 = math.tanh %44 : vector<8x128xf32>
      %46 = arith.mulf %40, %45 : vector<8x128xf32>
      %c0_26 = arith.constant 0 : index
      %c0_27 = arith.constant 0 : index
      %47 = vector.load %arg7[%c0_26, %c0_27] : memref<8x128xf32, #tpu.memory_space<vmem>>, vector<8x128xf32>
      tpu.vector_store %arg7[%c0_26, %c0_27], %44 {strides = array<i32>} : memref<8x128xf32, #tpu.memory_space<vmem>>, vector<8x128xf32>,
      %c0_28 = arith.constant 0 : index
      %c0_29 = arith.constant 0 : index
      %48 = vector.load %arg6[%c0_28, %c0_29] : memref<8x128xf32, #tpu.memory_space<vmem>>, vector<8x128xf32>
      tpu.vector_store %arg6[%c0_28, %c0_29], %46 {strides = array<i32>} : memref<8x128xf32, #tpu.memory_space<vmem>>, vector<8x128xf32>,
      %c0_30 = arith.constant 0 : index
      %49 = arith.index_cast %arg8 : i32 to index
      %c0_31 = arith.constant 0 : index
      %c0_32 = arith.constant 0 : index
      %50 = vector.load %arg5[%c0_30, %49, %c0_31, %c0_32] : memref<1x8x8x128xf32, #tpu.memory_space<vmem>>, vector<1x1x8x128xf32>
      %51 = vector.shape_cast %50 : vector<1x1x8x128xf32> to vector<8x128xf32>
      %52 = vector.shape_cast %46 : vector<8x128xf32> to vector<1x1x8x128xf32>
      tpu.vector_store %arg5[%c0_30, %49, %c0_31, %c0_32], %52 {strides = array<i32>} : memref<1x8x8x128xf32, #tpu.memory_space<vmem>>, vector<1x1x8x128xf32>,
    }
    %c8_i32_13 = arith.constant 8 : i32
    return
  }
  func.func @transform_0(%arg0: i32) -> (i32, i32, i32, i32) {
    %c0_i32 = arith.constant 0 : i32
    %c0_i32_0 = arith.constant 0 : i32
    %c0_i32_1 = arith.constant 0 : i32
    %c0_i32_2 = arith.constant 0 : i32
    return %arg0, %c0_i32, %c0_i32_0, %c0_i32_1 : i32, i32, i32, i32
  }
  func.func @transform_1(%arg0: i32) -> (i32, i32, i32) {
    %c0_i32 = arith.constant 0 : i32
    %c0_i32_0 = arith.constant 0 : i32
    %c0_i32_1 = arith.constant 0 : i32
    return %arg0, %c0_i32, %c0_i32_0 : i32, i32, i32
  }
  func.func @transform_2(%arg0: i32) -> (i32, i32, i32) {
    %c0_i32 = arith.constant 0 : i32
    %c0_i32_0 = arith.constant 0 : i32
    %c0_i32_1 = arith.constant 0 : i32
    return %arg0, %c0_i32, %c0_i32_0 : i32, i32, i32
  }
  func.func @transform_3(%arg0: i32) -> (i32, i32, i32) {
    %c0_i32 = arith.constant 0 : i32
    %c0_i32_0 = arith.constant 0 : i32
    %c0_i32_1 = arith.constant 0 : i32
    return %arg0, %c0_i32, %c0_i32_0 : i32, i32, i32
  }
  func.func @transform_4(%arg0: i32) -> (i32, i32, i32, i32) {
    %c0_i32 = arith.constant 0 : i32
    %c0_i32_0 = arith.constant 0 : i32
    %c0_i32_1 = arith.constant 0 : i32
    %c0_i32_2 = arith.constant 0 : i32
    return %arg0, %c0_i32, %c0_i32_0, %c0_i32_1 : i32, i32, i32, i32
  }
}

</mosaic_0001>

<llo_original>
// kernel: tpu_custom_call.1
$region0: #{tpu_custom_call.1}
  #allocation0 [shape = 'u32[]', space=smem, size = 0x4, offset = 0x4, fixed_abs, tag = 'smem constant byte address 0x4 - core index']
  #allocation1 [shape = 'u32[144,128]{1,0:T(1,128)}', space=vmem, size = 0x12000, scoped, tag = 'internal scratch']
  #allocation2 [shape = 'f32[8,128]{1,0:T(8,128)}', space=vmem, size = 0x1000, scoped, tag = 'scratch operand']
  #allocation3 [shape = 'f32[8,128]{1,0:T(8,128)}', space=vmem, size = 0x1000, scoped, tag = 'scratch operand']
  %s0 = inlined_call_operand.hbm [shape: bf16[2,8,8,128], index: 0, kind: input, shape index: {}]
  %s1 = inlined_call_operand.hbm [shape: bf16[2,128,512], index: 1, kind: input, shape index: {}]
  %s2 = inlined_call_operand.hbm [shape: bf16[2,128,512], index: 2, kind: input, shape index: {}]
  %s3 = inlined_call_operand.vmem [shape: f32[2,1,512], index: 3, kind: input, shape index: {}]
  %s4 = inlined_call_operand.hbm [shape: f32[2,8,8,128], index: 4, kind: output, shape index: {}]
  %s5 = sld [smem:[#allocation0]]
  $region68: #{tpu_custom_call.1} parent=0
    _
  %s7 = ssub.s32 1, %s5
  %s8 = scalar_select 0, %s7, %s5
  $region1: #{tpu_custom_call.1} parent=0
    #allocation4 [shape = 'u8[32768]{0}', space=vmem, size = 0x8000, scoped, tag = 'input window, operand 0']
    #allocation5 [shape = 's32[2]{0}', space=sflag, size = 0x8, scoped, tag = 'scoped memory for tpu_custom_call.1']
    #allocation6 [shape = 's32[2]{0}', space=sflag, size = 0x8, scoped, tag = 'scoped memory for tpu_custom_call.1']
    #allocation7 [shape = 'u8[262144]{0}', space=vmem, size = 0x40000, scoped, tag = 'input window, operand 1']
    #allocation8 [shape = 's32[2]{0}', space=sflag, size = 0x8, scoped, tag = 'scoped memory for tpu_custom_call.1']
    #allocation9 [shape = 'u8[262144]{0}', space=vmem, size = 0x40000, scoped, tag = 'input window, operand 2']
    #allocation10 [shape = 'u8[65536]{0}', space=vmem, size = 0x10000, scoped, tag = 'output window, operand 0']
    %9 = vsyncpa [#allocation5], 0
    %s10 = scalar_lea.sflag [#allocation5], 1
    %11 = vsyncpa %s10, 0
    %12 = vsyncpa [#allocation8], 0
    %s13 = scalar_lea.sflag [#allocation8], 1
    %14 = vsyncpa %s13, 0
    %15 = vsyncpa [#allocation6], 0
    %s16 = scalar_lea.sflag [#allocation6], 1
    %17 = vsyncpa %s16, 0
    loop: start=0, step=1, limit=4
    $region2: #{tpu_custom_call.1} parent=1 // loop_pre_header
      _
    $region3: #{tpu_custom_call.1} parent=1 // loop_header
      %s19 = sphi 0, %s23
      %p20 = scmp.ge.s32.totalorder %s19, 4
      %s29 = sphi 0, %s31
      %s32 = sphi 0, %s29
      %s33 = sphi 0, %s32
      %s49 = sphi 0, %s33
      %s55 = sphi 0, %s57
      %s58 = sphi 0, %s55
      %s59 = sphi 0, %s58
      %s75 = sphi 0, %s59
      %s81 = sphi 0, %s83
      %s84 = sphi 0, %s81
      %s85 = sphi 0, %s84
      %s101 = sphi 0, %s85
      %s107 = sphi 0, %s109
      %s110 = sphi 0, %s107
      %s111 = sphi 0, %s110
      %s127 = sphi 0, %s111
      %s133 = sphi 0, %s135
      %s136 = sphi 0, %s133
      %s137 = sphi 0, %s136
      %s153 = sphi 0, %s137
    $region4: #{tpu_custom_call.1} parent=1 // loop_header_branch
      %22 = sbr.rel (%p20) target = $region8
    $region5: #{tpu_custom_call.1} parent=1 // loop_body
      %s24 = ssub.s32 %s19, 1
      %s25 = ssub.s32 %s19, 2
      %s26 = sadd.s32 %s19, 1
      %s27 = ssub.s32 %s19, %s26
      %p28 = scmp.eq.s32.totalorder %s27, 0
      %s30 = sadd.s32 %s29, 1
      %s31 = scalar_select %p28, %s29, %s30
      %p34 = pneg %p28
      %p35 = scmp.eq.s32.totalorder %s19, 1
      %p36 = por %p34, %p35
      %p37 = scmp.ne.s32.totalorder %s29, %s32
      %p38 = scmp.eq.s32.totalorder %s19, 0
      %p39 = por %p37, %p38
      %p40 = scmp.ne.s32.totalorder %s29, %s32
      %p41 = scmp.eq.s32.totalorder %s24, 1
      %p42 = por %p40, %p41
      %p43 = scmp.ne.s32.totalorder %s32, %s33
      %p44 = scmp.eq.s32.totalorder %s24, 0
      %p45 = por %p43, %p44
      %p46 = scmp.ne.s32.totalorder %s32, %s33
      %p47 = scmp.eq.s32.totalorder %s25, 1
      %p48 = por %p46, %p47
      %p50 = scmp.ne.s32.totalorder %s33, %s49
      %p51 = scmp.eq.s32.totalorder %s25, 0
      %p52 = por %p50, %p51
      %s53 = ssub.s32 %s19, %s26
      %p54 = scmp.eq.s32.totalorder %s53, 0
      %s56 = sadd.s32 %s55, 1
      %s57 = scalar_select %p54, %s55, %s56
      %p60 = pneg %p54
      %p61 = scmp.eq.s32.totalorder %s19, 1
      %p62 = por %p60, %p61
      %p63 = scmp.ne.s32.totalorder %s55, %s58
      %p64 = scmp.eq.s32.totalorder %s19, 0
      %p65 = por %p63, %p64
      %p66 = scmp.ne.s32.totalorder %s55, %s58
      %p67 = scmp.eq.s32.totalorder %s24, 1
      %p68 = por %p66, %p67
      %p69 = scmp.ne.s32.totalorder %s58, %s59
      %p70 = scmp.eq.s32.totalorder %s24, 0
      %p71 = por %p69, %p70
      %p72 = scmp.ne.s32.totalorder %s58, %s59
      %p73 = scmp.eq.s32.totalorder %s25, 1
      %p74 = por %p72, %p73
      %p76 = scmp.ne.s32.totalorder %s59, %s75
      %p77 = scmp.eq.s32.totalorder %s25, 0
      %p78 = por %p76, %p77
      %s79 = ssub.s32 %s19, %s26
      %p80 = scmp.eq.s32.totalorder %s79, 0
      %s82 = sadd.s32 %s81, 1
      %s83 = scalar_select %p80, %s81, %s82
      %p86 = pneg %p80
      %p87 = scmp.eq.s32.totalorder %s19, 1
      %p88 = por %p86, %p87
      %p89 = scmp.ne.s32.totalorder %s81, %s84
      %p90 = scmp.eq.s32.totalorder %s19, 0
      %p91 = por %p89, %p90
      %p92 = scmp.ne.s32.totalorder %s81, %s84
      %p93 = scmp.eq.s32.totalorder %s24, 1
      %p94 = por %p92, %p93
      %p95 = scmp.ne.s32.totalorder %s84, %s85
      %p96 = scmp.eq.s32.totalorder %s24, 0
      %p97 = por %p95, %p96
      %p98 = scmp.ne.s32.totalorder %s84, %s85
      %p99 = scmp.eq.s32.totalorder %s25, 1
      %p100 = por %p98, %p99
      %p102 = scmp.ne.s32.totalorder %s85, %s101
      %p103 = scmp.eq.s32.totalorder %s25, 0
      %p104 = por %p102, %p103
      %s105 = ssub.s32 %s19, %s26
      %p106 = scmp.eq.s32.totalorder %s105, 0
      %s108 = sadd.s32 %s107, 1
      %s109 = scalar_select %p106, %s107, %s108
      %p112 = pneg %p106
      %p113 = scmp.eq.s32.totalorder %s19, 1
      %p114 = por %p112, %p113
      %p115 = scmp.ne.s32.totalorder %s107, %s110
      %p116 = scmp.eq.s32.totalorder %s19, 0
      %p117 = por %p115, %p116
      %p118 = scmp.ne.s32.totalorder %s107, %s110
      %p119 = scmp.eq.s32.totalorder %s24, 1
      %p120 = por %p118, %p119
      %p121 = scmp.ne.s32.totalorder %s110, %s111
      %p122 = scmp.eq.s32.totalorder %s24, 0
      %p123 = por %p121, %p122
      %p124 = scmp.ne.s32.totalorder %s110, %s111
      %p125 = scmp.eq.s32.totalorder %s25, 1
      %p126 = por %p124, %p125
      %p128 = scmp.ne.s32.totalorder %s111, %s127
      %p129 = scmp.eq.s32.totalorder %s25, 0
      %p130 = por %p128, %p129
      %s131 = ssub.s32 %s19, %s26
      %p132 = scmp.eq.s32.totalorder %s131, 0
      %s134 = sadd.s32 %s133, 1
      %s135 = scalar_select %p132, %s133, %s134
      %p138 = pneg %p132
      %p139 = scmp.eq.s32.totalorder %s19, 1
      %p140 = por %p138, %p139
      %p141 = scmp.ne.s32.totalorder %s133, %s136
      %p142 = scmp.eq.s32.totalorder %s19, 0
      %p143 = por %p141, %p142
      %p144 = scmp.ne.s32.totalorder %s133, %s136
      %p145 = scmp.eq.s32.totalorder %s24, 1
      %p146 = por %p144, %p145
      %p147 = scmp.ne.s32.totalorder %s136, %s137
      %p148 = scmp.eq.s32.totalorder %s24, 0
      %p149 = por %p147, %p148
      %p150 = scmp.ne.s32.totalorder %s136, %s137
      %p151 = scmp.eq.s32.totalorder %s25, 1
      %p152 = por %p150, %p151
      %p154 = scmp.ne.s32.totalorder %s137, %s153
      %p155 = scmp.eq.s32.totalorder %s25, 0
      %p156 = por %p154, %p155
      %p157 = scmp.le.s32.totalorder 1, %s19
      %p158 = scmp.lt.s32.totalorder %s19, 3
      %p159 = pnand %p157, %p158
      %p160 = pneg %p159
      // Predicated region
      $region9: #{tpu_custom_call.1} parent=5 // pred_check
        _
      $region10: #{tpu_custom_call.1} parent=5 // pred_check_branch
        %162 = sbr.rel (%p159) target = $region12
      $region11: #{tpu_custom_call.1} parent=5 // pred_region
        %s163 = ssub.s32 %s19, 1
      $region12: #{tpu_custom_call.1} parent=5 // pred_fallthru
        _
      %p164 = scmp.lt.s32.totalorder %s19, 2
      // Predicated region
      $region13: #{tpu_custom_call.1} parent=5 // pred_check
        %p165 = pneg %p164
      $region14: #{tpu_custom_call.1} parent=5 // pred_check_branch
        %167 = sbr.rel (%p165) target = $region16
      $region15: #{tpu_custom_call.1} parent=5 // pred_region
        // Predicated region
        $region17: #{tpu_custom_call.1} parent=15 // pred_check
          %p168 = pneg %p39
        $region18: #{tpu_custom_call.1} parent=15 // pred_check_branch
          %170 = sbr.rel (%p168) target = $region20
        $region19: #{tpu_custom_call.1} parent=15 // pred_region
          %s171 = sand.u32 %s29, 1
          %s172 = scalar_lea.sflag [#allocation5], %s171
          %s173 = sand.u32 %s29, 1
          %s174 = smul.addr %s173, 32
          %s175 = scalar_lea.vmem [#allocation4], %s174
          %s177 = ssub.s32 512, 512
          %178 = vsyncadd %s172, %s177
          %s179 = smul.addr %s19, 8
          %s180 = smul.addr %s179, 64
          %s181 = scalar_lea.hbm %s0, %s180
          %s182 = sshll.u32 %s175, 4
          %s183 = int_to_ptr.vmem [resolvable:$true] %s182
          %188 = dma.hbm_to_vmem [thread:$0]  %s181, 512, %s183, %s172, 64, 64, 4
        $region20: #{tpu_custom_call.1} parent=15 // pred_fallthru
          _
        // Predicated region
        $region21: #{tpu_custom_call.1} parent=15 // pred_check
          %p189 = pneg %p65
        $region22: #{tpu_custom_call.1} parent=15 // pred_check_branch
          %191 = sbr.rel (%p189) target = $region24
        $region23: #{tpu_custom_call.1} parent=15 // pred_region
          %s192 = sand.u32 %s19, 1
          %s193 = scalar_lea.sflag [#allocation8], %s192
          %s194 = sand.u32 %s55, 1
          %s195 = smul.addr %s194, 256
          %s196 = scalar_lea.vmem [#allocation7], %s195
          %s198 = ssub.s32 4096, 4096
          %199 = vsyncadd %s193, %s198
          %s200 = smul.addr %s19, 64
          %s201 = smul.addr %s200, 64
          %s202 = scalar_lea.hbm %s1, %s201
          %s203 = sshll.u32 %s196, 4
          %s204 = int_to_ptr.vmem [resolvable:$true] %s203
          %209 = dma.hbm_to_vmem [thread:$0]  %s202, 4096, %s204, %s193, 256, 256, 16
        $region24: #{tpu_custom_call.1} parent=15 // pred_fallthru
          _
        // Predicated region
        $region25: #{tpu_custom_call.1} parent=15 // pred_check
          %p210 = pneg %p91
        $region26: #{tpu_custom_call.1} parent=15 // pred_check_branch
          %212 = sbr.rel (%p210) target = $region28
        $region27: #{tpu_custom_call.1} parent=15 // pred_region
          %s213 = sand.u32 %s19, 1
          %s214 = scalar_lea.sflag [#allocation8], %s213
          %s215 = sand.u32 %s81, 1
          %s216 = smul.addr %s215, 256
          %s217 = scalar_lea.vmem [#allocation9], %s216
          %s219 = ssub.s32 4096, 4096
          %220 = vsyncadd %s214, %s219
          %s221 = smul.addr %s19, 64
          %s222 = smul.addr %s221, 64
          %s223 = scalar_lea.hbm %s2, %s222
          %s224 = sshll.u32 %s217, 4
          %s225 = int_to_ptr.vmem [resolvable:$true] %s224
          %230 = dma.hbm_to_vmem [thread:$0]  %s223, 4096, %s225, %s214, 256, 256, 16
        $region28: #{tpu_custom_call.1} parent=15 // pred_fallthru
          _
        // Predicated region
        $region29: #{tpu_custom_call.1} parent=15 // pred_check
          %p231 = pneg %p117
        $region30: #{tpu_custom_call.1} parent=15 // pred_check_branch
          %233 = sbr.rel (%p231) target = $region32
        $region31: #{tpu_custom_call.1} parent=15 // pred_region
          %p234 = scmp.lt.s32.totalorder %s19, 1
          %s235 = scalar_select %p234, %s19, 1
          %s236 = smul.addr %s235, 4
          %s237 = scalar_lea.vmem %s3, %s236
        $region32: #{tpu_custom_call.1} parent=15 // pred_fallthru
          _
      $region16: #{tpu_custom_call.1} parent=5 // pred_fallthru
        _
      %p238 = scmp.le.s32.totalorder 1, %s19
      %p239 = scmp.lt.s32.totalorder %s19, 3
      %p240 = pnand %p238, %p239
      %p241 = pneg %p240
      // Predicated region
      $region33: #{tpu_custom_call.1} parent=5 // pred_check
        _
      $region34: #{tpu_custom_call.1} parent=5 // pred_check_branch
        %243 = sbr.rel (%p240) target = $region36
      $region35: #{tpu_custom_call.1} parent=5 // pred_region
        %s244 = ssub.s32 %s19, 1
        %s245 = sand.u32 %s32, 1
        %s246 = scalar_lea.sflag [#allocation5], %s245
        %s247 = sand.u32 %s32, 1
        %s248 = smul.addr %s247, 32
        %s249 = scalar_lea.vmem [#allocation4], %s248
        // Predicated region
        $region37: #{tpu_custom_call.1} parent=35 // pred_check
          %p250 = pneg %p45
        $region38: #{tpu_custom_call.1} parent=35 // pred_check_branch
          %252 = sbr.rel (%p250) target = $region40
        $region39: #{tpu_custom_call.1} parent=35 // pred_region
          %253 = dma.done %s246, 512
        $region40: #{tpu_custom_call.1} parent=35 // pred_fallthru
          _
        %s254 = sand.u32 %s24, 1
        %s255 = scalar_lea.sflag [#allocation8], %s254
        %s256 = sand.u32 %s58, 1
        %s257 = smul.addr %s256, 256
        %s258 = scalar_lea.vmem [#allocation7], %s257
        // Predicated region
        $region41: #{tpu_custom_call.1} parent=35 // pred_check
          %p259 = pneg %p71
        $region42: #{tpu_custom_call.1} parent=35 // pred_check_branch
          %261 = sbr.rel (%p259) target = $region44
        $region43: #{tpu_custom_call.1} parent=35 // pred_region
          %262 = dma.done %s255, 4096
        $region44: #{tpu_custom_call.1} parent=35 // pred_fallthru
          _
        %s263 = sand.u32 %s24, 1
        %s264 = scalar_lea.sflag [#allocation8], %s263
        %s265 = sand.u32 %s84, 1
        %s266 = smul.addr %s265, 256
        %s267 = scalar_lea.vmem [#allocation9], %s266
        // Predicated region
        $region45: #{tpu_custom_call.1} parent=35 // pred_check
          %p268 = pneg %p97
        $region46: #{tpu_custom_call.1} parent=35 // pred_check_branch
          %270 = sbr.rel (%p268) target = $region48
        $region47: #{tpu_custom_call.1} parent=35 // pred_region
          %271 = dma.done %s264, 4096
        $region48: #{tpu_custom_call.1} parent=35 // pred_fallthru
          _
        %s272 = sand.u32 %s32, 1
        %s273 = scalar_lea.sflag [#allocation5], %s272
        %s274 = sand.u32 %s32, 1
        %s275 = smul.addr %s274, 32
        %s276 = scalar_lea.vmem [#allocation4], %s275
        %p277 = pneg %p45
        %p278 = pneg %p42
        %s279 = sand.u32 %s24, 1
        %s280 = scalar_lea.sflag [#allocation8], %s279
        %s281 = sand.u32 %s58, 1
        %s282 = smul.addr %s281, 256
        %s283 = scalar_lea.vmem [#allocation7], %s282
        %p284 = pneg %p71
        %p285 = pneg %p68
        %s286 = sand.u32 %s24, 1
        %s287 = scalar_lea.sflag [#allocation8], %s286
        %s288 = sand.u32 %s84, 1
        %s289 = smul.addr %s288, 256
        %s290 = scalar_lea.vmem [#allocation9], %s289
        %p291 = pneg %p97
        %p292 = pneg %p94
        %p293 = scmp.lt.s32.totalorder %s24, 1
        %s294 = scalar_select %p293, %s24, 1
        %s295 = smul.addr %s294, 4
        %s296 = scalar_lea.vmem %s3, %s295
        %p297 = pneg %p123
        %p298 = pneg %p120
        %p299 = pneg %p149
        %p300 = pneg %p146
        %s301 = sand.u32 %s136, 1
        %s302 = scalar_lea.sflag [#allocation6], %s301
        %s303 = sand.u32 %s136, 1
        %s304 = smul.addr %s303, 64
        %s305 = scalar_lea.vmem [#allocation10], %s304
        %p306 = scmp.lt.s32.totalorder %s24, 1
        %s307 = scalar_select %p306, %s24, 1
        %s308 = smul.addr %s307, 4
        %s309 = scalar_lea.vmem %s3, %s308
        %311 = vst [vmem:[#allocation2] sm:$0xff] 0.0
        %312 = vst [vmem:[#allocation3] sm:$0xff] 0.0
        %v313 = vld [vmem:[%s258] sm:$0xff]
        %v314 = vld [vmem:[%s258 + $0x8] sm:$0xff]
        %v315 = vld [vmem:[%s258 + $0x10] sm:$0xff]
        %v316 = vld [vmem:[%s258 + $0x18] sm:$0xff]
        %v317 = vld [vmem:[%s258 + $0x20] sm:$0xff]
        %v318 = vld [vmem:[%s258 + $0x28] sm:$0xff]
        %v319 = vld [vmem:[%s258 + $0x30] sm:$0xff]
        %v320 = vld [vmem:[%s258 + $0x38] sm:$0xff]
        %v321 = vld [vmem:[%s258 + $0x40] sm:$0xff]
        %v322 = vld [vmem:[%s258 + $0x48] sm:$0xff]
        %v323 = vld [vmem:[%s258 + $0x50] sm:$0xff]
        %v324 = vld [vmem:[%s258 + $0x58] sm:$0xff]
        %v325 = vld [vmem:[%s258 + $0x60] sm:$0xff]
        %v326 = vld [vmem:[%s258 + $0x68] sm:$0xff]
        %v327 = vld [vmem:[%s258 + $0x70] sm:$0xff]
        %v328 = vld [vmem:[%s258 + $0x78] sm:$0xff]
        %v329 = vld [vmem:[%s258 + $0x80] sm:$0xff]
        %v330 = vld [vmem:[%s258 + $0x88] sm:$0xff]
        %v331 = vld [vmem:[%s258 + $0x90] sm:$0xff]
        %v332 = vld [vmem:[%s258 + $0x98] sm:$0xff]
        %v333 = vld [vmem:[%s258 + $0xa0] sm:$0xff]
        %v334 = vld [vmem:[%s258 + $0xa8] sm:$0xff]
        %v335 = vld [vmem:[%s258 + $0xb0] sm:$0xff]
        %v336 = vld [vmem:[%s258 + $0xb8] sm:$0xff]
        %v337 = vld [vmem:[%s258 + $0xc0] sm:$0xff]
        %v338 = vld [vmem:[%s258 + $0xc8] sm:$0xff]
        %v339 = vld [vmem:[%s258 + $0xd0] sm:$0xff]
        %v340 = vld [vmem:[%s258 + $0xd8] sm:$0xff]
        %v341 = vld [vmem:[%s258 + $0xe0] sm:$0xff]
        %v342 = vld [vmem:[%s258 + $0xe8] sm:$0xff]
        %v343 = vld [vmem:[%s258 + $0xf0] sm:$0xff]
        %v344 = vld [vmem:[%s258 + $0xf8] sm:$0xff]
        %v345 = vld [vmem:[%s267] sm:$0xff]
        %v346 = vld [vmem:[%s267 + $0x8] sm:$0xff]
        %v347 = vld [vmem:[%s267 + $0x10] sm:$0xff]
        %v348 = vld [vmem:[%s267 + $0x18] sm:$0xff]
        %v349 = vld [vmem:[%s267 + $0x20] sm:$0xff]
        %v350 = vld [vmem:[%s267 + $0x28] sm:$0xff]
        %v351 = vld [vmem:[%s267 + $0x30] sm:$0xff]
        %v352 = vld [vmem:[%s267 + $0x38] sm:$0xff]
        %v353 = vld [vmem:[%s267 + $0x40] sm:$0xff]
        %v354 = vld [vmem:[%s267 + $0x48] sm:$0xff]
        %v355 = vld [vmem:[%s267 + $0x50] sm:$0xff]
        %v356 = vld [vmem:[%s267 + $0x58] sm:$0xff]
        %v357 = vld [vmem:[%s267 + $0x60] sm:$0xff]
        %v358 = vld [vmem:[%s267 + $0x68] sm:$0xff]
        %v359 = vld [vmem:[%s267 + $0x70] sm:$0xff]
        %v360 = vld [vmem:[%s267 + $0x78] sm:$0xff]
        %v361 = vld [vmem:[%s267 + $0x80] sm:$0xff]
        %v362 = vld [vmem:[%s267 + $0x88] sm:$0xff]
        %v363 = vld [vmem:[%s267 + $0x90] sm:$0xff]
        %v364 = vld [vmem:[%s267 + $0x98] sm:$0xff]
        %v365 = vld [vmem:[%s267 + $0xa0] sm:$0xff]
        %v366 = vld [vmem:[%s267 + $0xa8] sm:$0xff]
        %v367 = vld [vmem:[%s267 + $0xb0] sm:$0xff]
        %v368 = vld [vmem:[%s267 + $0xb8] sm:$0xff]
        %v369 = vld [vmem:[%s267 + $0xc0] sm:$0xff]
        %v370 = vld [vmem:[%s267 + $0xc8] sm:$0xff]
        %v371 = vld [vmem:[%s267 + $0xd0] sm:$0xff]
        %v372 = vld [vmem:[%s267 + $0xd8] sm:$0xff]
        %v373 = vld [vmem:[%s267 + $0xe0] sm:$0xff]
        %v374 = vld [vmem:[%s267 + $0xe8] sm:$0xff]
        %v375 = vld [vmem:[%s267 + $0xf0] sm:$0xff]
        %v376 = vld [vmem:[%s267 + $0xf8] sm:$0xff]
        %v377 = vld [vmem:[%s309] sm:$0xf]
        loop: start=0, step=1, limit=8
        $region49: #{tpu_custom_call.1} parent=35 // loop_pre_header
          _
        $region50: #{tpu_custom_call.1} parent=35 // loop_header
          %s379 = sphi 0, %s383
          %p380 = scmp.ge.s32.totalorder %s379, 8
        $region51: #{tpu_custom_call.1} parent=35 // loop_header_branch
          %382 = sbr.rel (%p380) target = $region55
        $region52: #{tpu_custom_call.1} parent=35 // loop_body
          %s384 = smul.addr %s379, 4
          %s385 = scalar_lea.vmem %s249, %s384 [#allocation4]
          %v386 = vld [vmem:[%s385] sm:$0xf]
          %v387 = vld [vmem:[#allocation2] sm:$0xff]
          %v388 = vpack.c.bf16 %v387, %v387
          %v421 = vunpack.c.l.b16 %v345
          %v422 = vunpack.c.h.b16 %v345
          %v423 = vunpack.c.l.b16 %v346
          %v424 = vunpack.c.h.b16 %v346
          %v425 = vunpack.c.l.b16 %v347
          %v426 = vunpack.c.h.b16 %v347
          %v427 = vunpack.c.l.b16 %v348
          %v428 = vunpack.c.h.b16 %v348
          %v429 = vunpack.c.l.b16 %v349
          %v430 = vunpack.c.h.b16 %v349
          %v431 = vunpack.c.l.b16 %v350
          %v432 = vunpack.c.h.b16 %v350
          %v433 = vunpack.c.l.b16 %v351
          %v434 = vunpack.c.h.b16 %v351
          %v435 = vunpack.c.l.b16 %v352
          %v436 = vunpack.c.h.b16 %v352
          %v437 = vunpack.c.l.b16 %v353
          %v438 = vunpack.c.h.b16 %v353
          %v439 = vunpack.c.l.b16 %v354
          %v440 = vunpack.c.h.b16 %v354
          %v441 = vunpack.c.l.b16 %v355
          %v442 = vunpack.c.h.b16 %v355
          %v443 = vunpack.c.l.b16 %v356
          %v444 = vunpack.c.h.b16 %v356
          %v445 = vunpack.c.l.b16 %v357
          %v446 = vunpack.c.h.b16 %v357
          %v447 = vunpack.c.l.b16 %v358
          %v448 = vunpack.c.h.b16 %v358
          %v449 = vunpack.c.l.b16 %v359
          %v450 = vunpack.c.h.b16 %v359
          %v451 = vunpack.c.l.b16 %v360
          %v452 = vunpack.c.h.b16 %v360
          %v453 = vunpack.c.l.b16 %v361
          %v454 = vunpack.c.h.b16 %v361
          %v455 = vunpack.c.l.b16 %v362
          %v456 = vunpack.c.h.b16 %v362
          %v457 = vunpack.c.l.b16 %v363
          %v458 = vunpack.c.h.b16 %v363
          %v459 = vunpack.c.l.b16 %v364
          %v460 = vunpack.c.h.b16 %v364
          %v461 = vunpack.c.l.b16 %v365
          %v462 = vunpack.c.h.b16 %v365
          %v463 = vunpack.c.l.b16 %v366
          %v464 = vunpack.c.h.b16 %v366
          %v465 = vunpack.c.l.b16 %v367
          %v466 = vunpack.c.h.b16 %v367
          %v467 = vunpack.c.l.b16 %v368
          %v468 = vunpack.c.h.b16 %v368
          %v469 = vunpack.c.l.b16 %v369
          %v470 = vunpack.c.h.b16 %v369
          %v471 = vunpack.c.l.b16 %v370
          %v472 = vunpack.c.h.b16 %v370
          %v473 = vunpack.c.l.b16 %v371
          %v474 = vunpack.c.h.b16 %v371
          %v475 = vunpack.c.l.b16 %v372
          %v476 = vunpack.c.h.b16 %v372
          %v477 = vunpack.c.l.b16 %v373
          %v478 = vunpack.c.h.b16 %v373
          %v479 = vunpack.c.l.b16 %v374
          %v480 = vunpack.c.h.b16 %v374
          %v481 = vunpack.c.l.b16 %v375
          %v482 = vunpack.c.h.b16 %v375
          %v483 = vunpack.c.l.b16 %v376
          %v484 = vunpack.c.h.b16 %v376
          %v485 = vpack.c.b16 %v425, %v421
          %v486 = vpack.c.b16 %v426, %v422
          %v487 = vpack.c.b16 %v427, %v423
          %v488 = vpack.c.b16 %v428, %v424
          %v489 = vpack.c.b16 %v433, %v429
          %v490 = vpack.c.b16 %v434, %v430
          %v491 = vpack.c.b16 %v435, %v431
          %v492 = vpack.c.b16 %v436, %v432
          %v493 = vpack.c.b16 %v441, %v437
          %v494 = vpack.c.b16 %v442, %v438
          %v495 = vpack.c.b16 %v443, %v439
          %v496 = vpack.c.b16 %v444, %v440
          %v497 = vpack.c.b16 %v449, %v445
          %v498 = vpack.c.b16 %v450, %v446
          %v499 = vpack.c.b16 %v451, %v447
          %v500 = vpack.c.b16 %v452, %v448
          %v501 = vpack.c.b16 %v457, %v453
          %v502 = vpack.c.b16 %v458, %v454
          %v503 = vpack.c.b16 %v459, %v455
          %v504 = vpack.c.b16 %v460, %v456
          %v505 = vpack.c.b16 %v465, %v461
          %v506 = vpack.c.b16 %v466, %v462
          %v507 = vpack.c.b16 %v467, %v463
          %v508 = vpack.c.b16 %v468, %v464
          %v509 = vpack.c.b16 %v473, %v469
          %v510 = vpack.c.b16 %v474, %v470
          %v511 = vpack.c.b16 %v475, %v471
          %v512 = vpack.c.b16 %v476, %v472
          %v513 = vpack.c.b16 %v481, %v477
          %v514 = vpack.c.b16 %v482, %v478
          %v515 = vpack.c.b16 %v483, %v479
          %v516 = vpack.c.b16 %v484, %v480
          %549 = vmatprep.subr.bf16.mxu0 %v486
          %550 = vmatpush1.bf16.msra.mxu0 %v485
          %551 = vmatprep.subr.bf16.mxu0 %v490
          %552 = vmatpush1.bf16.msra.mxu0 %v489
          %553 = vmatprep.subr.bf16.mxu0 %v494
          %554 = vmatpush1.bf16.msra.mxu0 %v493
          %555 = vmatprep.subr.bf16.mxu0 %v498
          %556 = vmatpush1.bf16.msra.mxu0 %v497
          %557 = vmatprep.subr.bf16.mxu0 %v502
          %558 = vmatpush1.bf16.msra.mxu0 %v501
          %559 = vmatprep.subr.bf16.mxu0 %v506
          %560 = vmatpush1.bf16.msra.mxu0 %v505
          %561 = vmatprep.subr.bf16.mxu0 %v510
          %562 = vmatpush1.bf16.msra.mxu0 %v509
          %563 = vmatprep.subr.bf16.mxu0 %v514
          %564 = vmatpush1.bf16.msra.mxu0 %v513
          %565 = vmatprep.subr.bf16.mxu0 0
          %566 = vmatpush1.bf16.msra.mxu0 0
          %567 = vmatprep.subr.bf16.mxu0 0
          %568 = vmatpush1.bf16.msra.mxu0 0
          %569 = vmatprep.subr.bf16.mxu0 0
          %570 = vmatpush1.bf16.msra.mxu0 0
          %571 = vmatprep.subr.bf16.mxu0 0
          %572 = vmatpush1.bf16.msra.mxu0 0
          %573 = vmatprep.subr.bf16.mxu0 0
          %574 = vmatpush1.bf16.msra.mxu0 0
          %575 = vmatprep.subr.bf16.mxu0 0
          %576 = vmatpush1.bf16.msra.mxu0 0
          %577 = vmatprep.subr.bf16.mxu0 0
          %578 = vmatpush1.bf16.msra.mxu0 0
          %579 = vmatprep.subr.bf16.mxu0 0
          %580 = vmatpush1.bf16.msra.mxu0 0
          %581 = vmatprep.mubr.bf16.mxu0 0
          %582 = vmatmul.mubr.bf16.gmra.mrb[0].mxu0 %v388
          %v583 = vpop.f32.mrb[0].mxu0
          %v584 = vadd.f32 0.0, %v583
          %v585 = vpop.f32.mrb[0].mxu0
          %v586 = vadd.f32 0.0, %v585
          %v587 = vpop.f32.mrb[0].mxu0
          %v588 = vpop.f32.mrb[0].mxu0
          %589 = vdwg.mxu0
          %590 = vmatprep.subr.bf16.mxu0 %v488
          %591 = vmatpush1.bf16.msra.mxu0 %v487
          %592 = vmatprep.subr.bf16.mxu0 %v492
          %593 = vmatpush1.bf16.msra.mxu0 %v491
          %594 = vmatprep.subr.bf16.mxu0 %v496
          %595 = vmatpush1.bf16.msra.mxu0 %v495
          %596 = vmatprep.subr.bf16.mxu0 %v500
          %597 = vmatpush1.bf16.msra.mxu0 %v499
          %598 = vmatprep.subr.bf16.mxu0 %v504
          %599 = vmatpush1.bf16.msra.mxu0 %v503
          %600 = vmatprep.subr.bf16.mxu0 %v508
          %601 = vmatpush1.bf16.msra.mxu0 %v507
          %602 = vmatprep.subr.bf16.mxu0 %v512
          %603 = vmatpush1.bf16.msra.mxu0 %v511
          %604 = vmatprep.subr.bf16.mxu0 %v516
          %605 = vmatpush1.bf16.msra.mxu0 %v515
          %606 = vmatprep.subr.bf16.mxu0 0
          %607 = vmatpush1.bf16.msra.mxu0 0
          %608 = vmatprep.subr.bf16.mxu0 0
          %609 = vmatpush1.bf16.msra.mxu0 0
          %610 = vmatprep.subr.bf16.mxu0 0
          %611 = vmatpush1.bf16.msra.mxu0 0
          %612 = vmatprep.subr.bf16.mxu0 0
          %613 = vmatpush1.bf16.msra.mxu0 0
          %614 = vmatprep.subr.bf16.mxu0 0
          %615 = vmatpush1.bf16.msra.mxu0 0
          %616 = vmatprep.subr.bf16.mxu0 0
          %617 = vmatpush1.bf16.msra.mxu0 0
          %618 = vmatprep.subr.bf16.mxu0 0
          %619 = vmatpush1.bf16.msra.mxu0 0
          %620 = vmatprep.subr.bf16.mxu0 0
          %621 = vmatpush1.bf16.msra.mxu0 0
          %622 = vmatprep.mubr.bf16.mxu0 0
          %623 = vmatmul.mubr.bf16.gmra.mrb[0].mxu0 %v388
          %v624 = vpop.f32.mrb[0].mxu0
          %v625 = vadd.f32 0.0, %v624
          %v626 = vpop.f32.mrb[0].mxu0
          %v627 = vadd.f32 0.0, %v626
          %v628 = vpop.f32.mrb[0].mxu0
          %v629 = vpop.f32.mrb[0].mxu0
          %630 = vdwg.mxu0
          %v663 = vunpack.c.l.b16 %v313
          %v664 = vunpack.c.h.b16 %v313
          %v665 = vunpack.c.l.b16 %v314
          %v666 = vunpack.c.h.b16 %v314
          %v667 = vunpack.c.l.b16 %v315
          %v668 = vunpack.c.h.b16 %v315
          %v669 = vunpack.c.l.b16 %v316
          %v670 = vunpack.c.h.b16 %v316
          %v671 = vunpack.c.l.b16 %v317
          %v672 = vunpack.c.h.b16 %v317
          %v673 = vunpack.c.l.b16 %v318
          %v674 = vunpack.c.h.b16 %v318
          %v675 = vunpack.c.l.b16 %v319
          %v676 = vunpack.c.h.b16 %v319
          %v677 = vunpack.c.l.b16 %v320
          %v678 = vunpack.c.h.b16 %v320
          %v679 = vunpack.c.l.b16 %v321
          %v680 = vunpack.c.h.b16 %v321
          %v681 = vunpack.c.l.b16 %v322
          %v682 = vunpack.c.h.b16 %v322
          %v683 = vunpack.c.l.b16 %v323
          %v684 = vunpack.c.h.b16 %v323
          %v685 = vunpack.c.l.b16 %v324
          %v686 = vunpack.c.h.b16 %v324
          %v687 = vunpack.c.l.b16 %v325
          %v688 = vunpack.c.h.b16 %v325
          %v689 = vunpack.c.l.b16 %v326
          %v690 = vunpack.c.h.b16 %v326
          %v691 = vunpack.c.l.b16 %v327
          %v692 = vunpack.c.h.b16 %v327
          %v693 = vunpack.c.l.b16 %v328
          %v694 = vunpack.c.h.b16 %v328
          %v695 = vunpack.c.l.b16 %v329
          %v696 = vunpack.c.h.b16 %v329
          %v697 = vunpack.c.l.b16 %v330
          %v698 = vunpack.c.h.b16 %v330
          %v699 = vunpack.c.l.b16 %v331
          %v700 = vunpack.c.h.b16 %v331
          %v701 = vunpack.c.l.b16 %v332
          %v702 = vunpack.c.h.b16 %v332
          %v703 = vunpack.c.l.b16 %v333
          %v704 = vunpack.c.h.b16 %v333
          %v705 = vunpack.c.l.b16 %v334
          %v706 = vunpack.c.h.b16 %v334
          %v707 = vunpack.c.l.b16 %v335
          %v708 = vunpack.c.h.b16 %v335
          %v709 = vunpack.c.l.b16 %v336
          %v710 = vunpack.c.h.b16 %v336
          %v711 = vunpack.c.l.b16 %v337
          %v712 = vunpack.c.h.b16 %v337
          %v713 = vunpack.c.l.b16 %v338
          %v714 = vunpack.c.h.b16 %v338
          %v715 = vunpack.c.l.b16 %v339
          %v716 = vunpack.c.h.b16 %v339
          %v717 = vunpack.c.l.b16 %v340
          %v718 = vunpack.c.h.b16 %v340
          %v719 = vunpack.c.l.b16 %v341
          %v720 = vunpack.c.h.b16 %v341
          %v721 = vunpack.c.l.b16 %v342
          %v722 = vunpack.c.h.b16 %v342
          %v723 = vunpack.c.l.b16 %v343
          %v724 = vunpack.c.h.b16 %v343
          %v725 = vunpack.c.l.b16 %v344
          %v726 = vunpack.c.h.b16 %v344
          %v727 = vpack.c.b16 %v667, %v663
          %v728 = vpack.c.b16 %v668, %v664
          %v729 = vpack.c.b16 %v669, %v665
          %v730 = vpack.c.b16 %v670, %v666
          %v731 = vpack.c.b16 %v675, %v671
          %v732 = vpack.c.b16 %v676, %v672
          %v733 = vpack.c.b16 %v677, %v673
          %v734 = vpack.c.b16 %v678, %v674
          %v735 = vpack.c.b16 %v683, %v679
          %v736 = vpack.c.b16 %v684, %v680
          %v737 = vpack.c.b16 %v685, %v681
          %v738 = vpack.c.b16 %v686, %v682
          %v739 = vpack.c.b16 %v691, %v687
          %v740 = vpack.c.b16 %v692, %v688
          %v741 = vpack.c.b16 %v693, %v689
          %v742 = vpack.c.b16 %v694, %v690
          %v743 = vpack.c.b16 %v699, %v695
          %v744 = vpack.c.b16 %v700, %v696
          %v745 = vpack.c.b16 %v701, %v697
          %v746 = vpack.c.b16 %v702, %v698
          %v747 = vpack.c.b16 %v707, %v703
          %v748 = vpack.c.b16 %v708, %v704
          %v749 = vpack.c.b16 %v709, %v705
          %v750 = vpack.c.b16 %v710, %v706
          %v751 = vpack.c.b16 %v715, %v711
          %v752 = vpack.c.b16 %v716, %v712
          %v753 = vpack.c.b16 %v717, %v713
          %v754 = vpack.c.b16 %v718, %v714
          %v755 = vpack.c.b16 %v723, %v719
          %v756 = vpack.c.b16 %v724, %v720
          %v757 = vpack.c.b16 %v725, %v721
          %v758 = vpack.c.b16 %v726, %v722
          %791 = vmatprep.subr.bf16.mxu0 %v728
          %792 = vmatpush1.bf16.msra.mxu0 %v727
          %793 = vmatprep.subr.bf16.mxu0 %v732
          %794 = vmatpush1.bf16.msra.mxu0 %v731
          %795 = vmatprep.subr.bf16.mxu0 %v736
          %796 = vmatpush1.bf16.msra.mxu0 %v735
          %797 = vmatprep.subr.bf16.mxu0 %v740
          %798 = vmatpush1.bf16.msra.mxu0 %v739
          %799 = vmatprep.subr.bf16.mxu0 %v744
          %800 = vmatpush1.bf16.msra.mxu0 %v743
          %801 = vmatprep.subr.bf16.mxu0 %v748
          %802 = vmatpush1.bf16.msra.mxu0 %v747
          %803 = vmatprep.subr.bf16.mxu0 %v752
          %804 = vmatpush1.bf16.msra.mxu0 %v751
          %805 = vmatprep.subr.bf16.mxu0 %v756
          %806 = vmatpush1.bf16.msra.mxu0 %v755
          %807 = vmatprep.subr.bf16.mxu0 0
          %808 = vmatpush1.bf16.msra.mxu0 0
          %809 = vmatprep.subr.bf16.mxu0 0
          %810 = vmatpush1.bf16.msra.mxu0 0
          %811 = vmatprep.subr.bf16.mxu0 0
          %812 = vmatpush1.bf16.msra.mxu0 0
          %813 = vmatprep.subr.bf16.mxu0 0
          %814 = vmatpush1.bf16.msra.mxu0 0
          %815 = vmatprep.subr.bf16.mxu0 0
          %816 = vmatpush1.bf16.msra.mxu0 0
          %817 = vmatprep.subr.bf16.mxu0 0
          %818 = vmatpush1.bf16.msra.mxu0 0
          %819 = vmatprep.subr.bf16.mxu0 0
          %820 = vmatpush1.bf16.msra.mxu0 0
          %821 = vmatprep.subr.bf16.mxu0 0
          %822 = vmatpush1.bf16.msra.mxu0 0
          %823 = vmatprep.mubr.bf16.mxu0 0
          %824 = vmatmul.mubr.bf16.gmra.mrb[0].mxu0 %v386
          %v825 = vpop.f32.mrb[0].mxu0
          %v826 = vadd.f32 %v584, %v825
          %v827 = vpop.f32.mrb[0].mxu0
          %v828 = vadd.f32 %v586, %v827
          %v829 = vpop.f32.mrb[0].mxu0
          %v830 = vpop.f32.mrb[0].mxu0
          %831 = vdwg.mxu0
          %832 = vmatprep.subr.bf16.mxu0 %v730
          %833 = vmatpush1.bf16.msra.mxu0 %v729
          %834 = vmatprep.subr.bf16.mxu0 %v734
          %835 = vmatpush1.bf16.msra.mxu0 %v733
          %836 = vmatprep.subr.bf16.mxu0 %v738
          %837 = vmatpush1.bf16.msra.mxu0 %v737
          %838 = vmatprep.subr.bf16.mxu0 %v742
          %839 = vmatpush1.bf16.msra.mxu0 %v741
          %840 = vmatprep.subr.bf16.mxu0 %v746
          %841 = vmatpush1.bf16.msra.mxu0 %v745
          %842 = vmatprep.subr.bf16.mxu0 %v750
          %843 = vmatpush1.bf16.msra.mxu0 %v749
          %844 = vmatprep.subr.bf16.mxu0 %v754
          %845 = vmatpush1.bf16.msra.mxu0 %v753
          %846 = vmatprep.subr.bf16.mxu0 %v758
          %847 = vmatpush1.bf16.msra.mxu0 %v757
          %848 = vmatprep.subr.bf16.mxu0 0
          %849 = vmatpush1.bf16.msra.mxu0 0
          %850 = vmatprep.subr.bf16.mxu0 0
          %851 = vmatpush1.bf16.msra.mxu0 0
          %852 = vmatprep.subr.bf16.mxu0 0
          %853 = vmatpush1.bf16.msra.mxu0 0
          %854 = vmatprep.subr.bf16.mxu0 0
          %855 = vmatpush1.bf16.msra.mxu0 0
          %856 = vmatprep.subr.bf16.mxu0 0
          %857 = vmatpush1.bf16.msra.mxu0 0
          %858 = vmatprep.subr.bf16.mxu0 0
          %859 = vmatpush1.bf16.msra.mxu0 0
          %860 = vmatprep.subr.bf16.mxu0 0
          %861 = vmatpush1.bf16.msra.mxu0 0
          %862 = vmatprep.subr.bf16.mxu0 0
          %863 = vmatpush1.bf16.msra.mxu0 0
          %864 = vmatprep.mubr.bf16.mxu0 0
          %865 = vmatmul.mubr.bf16.gmra.mrb[0].mxu0 %v386
          %v866 = vpop.f32.mrb[0].mxu0
          %v867 = vadd.f32 %v625, %v866
          %v868 = vpop.f32.mrb[0].mxu0
          %v869 = vadd.f32 %v627, %v868
          %v870 = vpop.f32.mrb[0].mxu0
          %v871 = vpop.f32.mrb[0].mxu0
          %872 = vdwg.mxu0
          %v874 = vlaneseq
          %v875 = vshrl.u32 %v874, 7
          %v876 = vsub.s32 0, %v875
          %v877 = vrot.slane %v377, %v876
          %v878 = vlaneseq
          %v879 = vshrl.u32 %v878, 7
          %v880 = vsub.s32 1, %v879
          %v881 = vrot.slane %v377, %v880
          %v882 = vlaneseq
          %v883 = vshrl.u32 %v882, 7
          %v884 = vsub.s32 2, %v883
          %v885 = vrot.slane %v377, %v884
          %v886 = vlaneseq
          %v887 = vshrl.u32 %v886, 7
          %v888 = vsub.s32 3, %v887
          %v889 = vrot.slane %v377, %v888
          %v894 = vadd.f32 %v826, %v877
          %v895 = vadd.f32 %v828, %v881
          %v896 = vadd.f32 %v867, %v885
          %v897 = vadd.f32 %v869, %v889
          %v898 = vxor.u32 %v894, 2147483648
          %v899 = vmul.f32 %v898, 1.442695
          %v900 = vpow.pop %v899
          %v901 = vadd.f32 %v900, 1.0
          %v902 = vrcp.pop %v901
          %v903 = vmul.f32 1.0, %v902
          %v904 = vxor.u32 %v895, 2147483648
          %v905 = vmul.f32 %v904, 1.442695
          %v906 = vpow.pop %v905
          %v907 = vadd.f32 %v906, 1.0
          %v908 = vrcp.pop %v907
          %v909 = vmul.f32 1.0, %v908
          %v910 = vtanh.pop %v896
          %v911 = vxor.u32 %v897, 2147483648
          %v912 = vmul.f32 %v911, 1.442695
          %v913 = vpow.pop %v912
          %v914 = vadd.f32 %v913, 1.0
          %v915 = vrcp.pop %v914
          %v916 = vmul.f32 1.0, %v915
          %v917 = vld [vmem:[#allocation3] sm:$0xff]
          %v918 = vmul.f32 %v909, %v917
          %v919 = vmul.f32 %v903, %v910
          %v920 = vadd.f32 %v918, %v919
          %v921 = vtanh.pop %v920
          %v922 = vmul.f32 %v916, %v921
          %923 = vst [vmem:[#allocation3] sm:$0xff] %v920
          %924 = vst [vmem:[#allocation2] sm:$0xff] %v922
          %s925 = smul.u32 %s379, 8
          %s926 = scalar_lea.vmem %s305, %s925 [#allocation10]
          %927 = vst [vmem:[%s926] sm:$0xff] %v922
        $region53: #{tpu_custom_call.1} parent=35 // loop_footer
          %s383 = sadd.s32 1, %s379
        $region54: #{tpu_custom_call.1} parent=35 // loop_footer_branch
          %378 = sbr.rel target = $region50
        $region55: #{tpu_custom_call.1} parent=35 // loop_exit
          _
        %s928 = sand.u32 %s136, 1
        %s929 = scalar_lea.sflag [#allocation6], %s928
        %s930 = sand.u32 %s136, 1
        %s931 = smul.addr %s930, 64
        %s932 = scalar_lea.vmem [#allocation10], %s931
        // Predicated region
        $region56: #{tpu_custom_call.1} parent=35 // pred_check
          %p933 = pneg %p146
        $region57: #{tpu_custom_call.1} parent=35 // pred_check_branch
          %935 = sbr.rel (%p933) target = $region59
        $region58: #{tpu_custom_call.1} parent=35 // pred_region
          %s937 = ssub.s32 1024, 1024
          %938 = vsyncadd %s929, %s937
          %s939 = smul.addr %s24, 8
          %s940 = smul.addr %s939, 128
          %s941 = scalar_lea.hbm %s4, %s940
          %s942 = sshll.u32 %s932, 4
          %s943 = int_to_ptr.vmem [resolvable:$true] %s942
          %948 = dma.vmem_to_hbm [thread:$0]  %s943, 1024, %s941, %s929, 128, 128, 8
        $region59: #{tpu_custom_call.1} parent=35 // pred_fallthru
          _
      $region36: #{tpu_custom_call.1} parent=5 // pred_fallthru
        _
      %p949 = scmp.le.s32.totalorder 2, %s19
      // Predicated region
      $region60: #{tpu_custom_call.1} parent=5 // pred_check
        %p950 = pneg %p949
      $region61: #{tpu_custom_call.1} parent=5 // pred_check_branch
        %952 = sbr.rel (%p950) target = $region63
      $region62: #{tpu_custom_call.1} parent=5 // pred_region
        %s953 = ssub.s32 %s19, 2
        // Predicated region
        $region64: #{tpu_custom_call.1} parent=62 // pred_check
          %p954 = pneg %p152
        $region65: #{tpu_custom_call.1} parent=62 // pred_check_branch
          %956 = sbr.rel (%p954) target = $region67
        $region66: #{tpu_custom_call.1} parent=62 // pred_region
          %s957 = sand.u32 %s137, 1
          %s958 = scalar_lea.sflag [#allocation6], %s957
          %s959 = sand.u32 %s137, 1
          %s960 = smul.addr %s959, 64
          %s961 = scalar_lea.vmem [#allocation10], %s960
          %962 = dma.done %s958, 1024
        $region67: #{tpu_custom_call.1} parent=62 // pred_fallthru
          _
      $region63: #{tpu_custom_call.1} parent=5 // pred_fallthru
        _
    $region6: #{tpu_custom_call.1} parent=1 // loop_footer
      %s23 = sadd.s32 1, %s19
    $region7: #{tpu_custom_call.1} parent=1 // loop_footer_branch
      %18 = sbr.rel target = $region3
    $region8: #{tpu_custom_call.1} parent=1 // loop_exit
      _
    %963 = vsyncpa [#allocation5], 1
    %s964 = scalar_lea.sflag [#allocation5], 1
    %965 = vsyncpa %s964, 1
    %966 = vsyncpa [#allocation8], 1
    %s967 = scalar_lea.sflag [#allocation8], 1
    %968 = vsyncpa %s967, 1
    %969 = vsyncpa [#allocation6], 1
    %s970 = scalar_lea.sflag [#allocation6], 1
    %971 = vsyncpa %s970, 1

</llo_original>
